<compile_context>
chip_gen: v5e
topology: v5e:2x2
jax: 0.10.0
libtpu: 0.0.40
codegen_flags: <defaults>
</compile_context>

<pallas_src>
import functools

import jax
import jax.numpy as jnp
from jax.experimental import pallas as pl
from jax.experimental.pallas import tpu as pltpu


def _merge_ln_project_kernel(x_ref, w_ref, cs_ref, b_ref, o_ref, *,
                             eps, rows, c2, mxu_dtype):
    """One grid step: `rows = rt * Wp` merged tokens.

    x_ref : (rt, 2, Wp, 2C) raw input slab; [:, dy] holds, for row parity dy, the two
            horizontally adjacent pixels (dx = 0, 1) of each output token as one
            contiguous 2C-wide feature chunk (feature index dx*C + c).
    w_ref : (2, 2C, N)  gamma-folded weight, K rows permuted to (dy, dx*C + c) order.
    cs_ref: (1, N)      csum_n = sum_k gamma_k * W[n, k]   (f32)
    b_ref : (1, N)      bias_n = sum_k beta_k  * W[n, k]   (f32)
    o_ref : (rows, N)
    """
    # TODO(synk): when Wp % 8 != 0 this (rt, Wp, 2C) -> (rows, 2C) flatten may cost a
    # sublane relayout copy of the (bf16) operand; keeping it 3-D would need rank-3 dot.
    x0 = x_ref[:, 0, :, :].reshape(rows, c2)
    x1 = x_ref[:, 1, :, :].reshape(rows, c2)
    x0f = x0.astype(jnp.float32)
    x1f = x1.astype(jnp.float32)

    # Single-pass LayerNorm statistics over the full 4C features (partial sums per half).
    inv_k = 1.0 / (2 * c2)
    s = jnp.sum(x0f, axis=-1, keepdims=True) + jnp.sum(x1f, axis=-1, keepdims=True)
    ss = (jnp.sum(x0f * x0f, axis=-1, keepdims=True)
          + jnp.sum(x1f * x1f, axis=-1, keepdims=True))
    mean = s * inv_k
    var = jnp.maximum(ss * inv_k - mean * mean, 0.0)   # biased var (torch LN) + guard
    inv = jax.lax.rsqrt(var + eps)

    # gamma/beta folded into the weight:  out = ((x @ W') - mean*csum) * inv + bias.
    acc = jnp.dot(x0.astype(mxu_dtype), w_ref[0], preferred_element_type=jnp.float32)
    acc = acc + jnp.dot(x1.astype(mxu_dtype), w_ref[1], preferred_element_type=jnp.float32)
    out = (acc - mean * cs_ref[...]) * inv + b_ref[...]
    o_ref[...] = out.astype(o_ref.dtype)


def _vmem_config():
    """Generation-aware (IO-block budget, vmem_limit_bytes)."""
    try:
        cap = int(getattr(pltpu.get_tpu_info(), "vmem_capacity_bytes", 0)) or None
    except Exception:
        cap = None
    if cap is None:                              # unknown generation: safe everywhere
        return 16 * 1024 * 1024, 48 * 1024 * 1024
    if cap <= 64 * 1024 * 1024:                  # v7x: 64 MiB per TensorCore
        return 14 * 1024 * 1024, 48 * 1024 * 1024
    return 24 * 1024 * 1024, 64 * 1024 * 1024    # v5e / v6e: 128 MiB physical


def _pick_row_tile(G, Wp, per_rt_bytes, budget_bytes, target_rows=1024):
    """Row-group tile `rt` (each block covers rt*Wp merged tokens) for a cdiv grid.

    Constraints: fits the VMEM budget; output block second-minor (rt*Wp) is 8-aligned
    unless the whole problem is one block.  Preferences: >=4 grid steps (pipelining /
    megacore), even step count (balanced 2-TensorCore split on v7x), ~target_rows rows
    per step (>=85% of HBM roofline), minimal padded work in the last partial block.
    """
    max_rt = min(G, max(1, budget_bytes // max(per_rt_bytes, 1)))
    best = None
    for rt in range(1, max_rt + 1):
        rows = rt * Wp
        if rows % 8 != 0 and rt != G:
            continue
        steps = -(-G // rt)
        pad = rt * steps - G
        score = (0 if steps >= min(4, G) else 1,
                 steps % 2 if steps > 1 else 0,
                 pad,
                 abs(rows - target_rows))
        if best is None or score < best[0]:
            best = (score, rt)
    return G if best is None else best[1]


def patch_projection(x, gamma, beta, weight, input_resolution, *,
                     eps=1e-5, mxu_dtype=jnp.bfloat16):
    """Forward pass of PatchProjection.

    x:      (B, H*W, C)
    gamma:  (4*C,)      LayerNorm weight
    beta:   (4*C,)      LayerNorm bias
    weight: (2*C, 4*C)  nn.Linear weight (torch convention: out_features x in_features)
    returns (B, H/2 * W/2, 2*C), same dtype as x (bf16 in -> bf16 out halves HBM traffic).
    """
    H, W = input_resolution
    B, L, C = x.shape
    assert L == H * W, "input feature has wrong size"
    assert H % 2 == 0 and W % 2 == 0, f"x size ({H}*{W}) are not even."

    Hp, Wp = H // 2, W // 2
    G = B * Hp                 # row groups; each yields Wp merged tokens
    M = G * Wp                 # total merged tokens
    C2 = 2 * C                 # one row-parity half of the merged 4C features
    N = 2 * C                  # output features

    # Free reshape (metadata only): (B, H*W, C) -> (g = b*Hp+hp, dy, wp, dx*C + c).
    xr = x.reshape(G, 2, Wp, C2)

    # --- one-time parameter folding (tiny; fold into param prep in real use) -----------
    # torch concat order is [x(0,0), x(1,0), x(0,1), x(1,1)], i.e. feature t=(2*dx+dy)*C+c;
    # the kernel consumes halves ordered (dy, dx*C + c)  ->  permute (dx,dy,c)->(dy,dx,c).
    gamma_f = gamma.astype(jnp.float32)
    beta_f = beta.astype(jnp.float32)
    w_f = weight.astype(jnp.float32)                       # (N, 4C)
    w_scaled = (w_f * gamma_f[None, :]).T                  # (4C, N), row index t
    w_g = (w_scaled.reshape(2, 2, C, N).transpose(1, 0, 2, 3)
           .reshape(2, C2, N).astype(mxu_dtype))           # (dy, dx*C + c, n)
    csum = (w_f @ gamma_f).reshape(1, N)                   # f32
    bias = (w_f @ beta_f).reshape(1, N)                    # f32

    # --- tiling / VMEM budgeting --------------------------------------------------------
    in_item = x.dtype.itemsize
    out_item = x.dtype.itemsize
    mxu_item = jnp.dtype(mxu_dtype).itemsize
    io_budget, vmem_limit = _vmem_config()
    resident = 2 * (w_g.size * mxu_item + 2 * N * 4)       # worst case: double-buffered
    per_rt = (2 * (2 * Wp * C2 * in_item)                  # double-buffered input slab
              + 2 * (Wp * N * out_item)                    # double-buffered output block
              + Wp * (C2 * 16 + N * 8))                    # in-kernel f32/bf16 temps
    rt = _pick_row_tile(G, Wp, per_rt, max(io_budget - resident, 2 * 1024 * 1024))
    rows = rt * Wp
    grid = (pl.cdiv(G, rt),)

    kernel = functools.partial(_merge_ln_project_kernel, eps=eps, rows=rows, c2=C2,
                               mxu_dtype=mxu_dtype)
    cost = pl.CostEstimate(
        flops=2 * M * (2 * C2) * N,
        transcendentals=0,
        bytes_accessed=xr.size * in_item + M * N * out_item + w_g.size * mxu_item,
    )

    def build(single_buffer_residents):
        def resident_spec(shape):
            kwargs = ({"pipeline_mode": pl.Buffered(1)} if single_buffer_residents else {})
            return pl.BlockSpec(shape, lambda i: (0,) * len(shape), **kwargs)

        return pl.pallas_call(
            kernel,
            out_shape=jax.ShapeDtypeStruct((M, N), x.dtype),
            grid_spec=pltpu.PrefetchScalarGridSpec(
                num_scalar_prefetch=0,
                grid=grid,
                in_specs=[
                    pl.BlockSpec((rt, 2, Wp, C2), lambda i: (i, 0, 0, 0)),  # contiguous x slab
                    resident_spec((2, C2, N)),                              # gamma-folded W
                    resident_spec((1, N)),                                  # csum
                    resident_spec((1, N)),                                  # bias
                ],
                out_specs=pl.BlockSpec((rows, N), lambda i: (i, 0)),
            ),
            compiler_params=pltpu.CompilerParams(
                dimension_semantics=("parallel",),
                vmem_limit_bytes=vmem_limit,
            ),
            cost_estimate=cost,
        )

    try:
        out = build(True)(xr, w_g, csum, bias)
    except Exception:
        # Fallback if this Pallas version rejects pl.Buffered(1) on pallas_call BlockSpecs:
        # accept default double buffering of the (resident) parameters.
        out = build(False)(xr, w_g, csum, bias)

    # TODO(synk): when N = 2*C < 128 the final store is lane-sparse (masked vst); a
    # lane-dense (rows//k, k*N) output layout would need an in-kernel sublane->lane
    # relayout of acc, which is not obviously cheaper, so it is left as-is.
    return out.reshape(B, Hp * Wp, N)


def _reference(x, gamma, beta, weight, input_resolution, eps=1e-5):
    """Pure-JAX f32 reference with exact torch PatchProjection semantics."""
    H, W = input_resolution
    B, L, C = x.shape
    xg = x.astype(jnp.float32).reshape(B, H, W, C)
    x0 = xg[:, 0::2, 0::2, :]
    x1 = xg[:, 1::2, 0::2, :]
    x2 = xg[:, 0::2, 1::2, :]
    x3 = xg[:, 1::2, 1::2, :]
    m = jnp.concatenate([x0, x1, x2, x3], axis=-1).reshape(B, -1, 4 * C)
    mu = jnp.mean(m, axis=-1, keepdims=True)
    var = jnp.mean((m - mu) ** 2, axis=-1, keepdims=True)
    y = (m - mu) / jnp.sqrt(var + eps) * gamma + beta
    return jnp.einsum("blk,nk->bln", y, weight.astype(jnp.float32),
                      precision=jax.lax.Precision.HIGHEST)


if __name__ == "__main__":
    # Small shapes consistent with the module: B=2, H=W=16, dim=32 -> x: (2, 256, 32).
    B, H, W, dim = 2, 16, 16, 32
    key = jax.random.PRNGKey(0)
    kx, kw, kg, kb = jax.random.split(key, 4)

    x = jax.random.normal(kx, (B, H * W, dim), dtype=jnp.float32)
    # Deterministic synthetic parameters (torch conventions: weight is (2*dim, 4*dim)).
    weight = jax.random.normal(kw, (2 * dim, 4 * dim), dtype=jnp.float32) * 0.02
    gamma = jnp.ones((4 * dim,), jnp.float32) + 0.01 * jax.random.normal(kg, (4 * dim,))
    beta = 0.01 * jax.random.normal(kb, (4 * dim,))

    ref = _reference(x, gamma, beta, weight, (H, W))

    # f32 MXU operands: tight numerical check of the fused merge + LN + projection.
    out_f32 = jax.block_until_ready(
        patch_projection(x, gamma, beta, weight, (H, W), mxu_dtype=jnp.float32))
    assert out_f32.shape == (B, (H // 2) * (W // 2), 2 * dim)
    assert jnp.allclose(out_f32, ref, atol=3e-3, rtol=3e-3), "f32-path mismatch vs reference"

    # Default bf16 MXU operands (f32 LN statistics, f32 accumulation).
    out_bf16mxu = jax.block_until_ready(patch_projection(x, gamma, beta, weight, (H, W)))
    assert jnp.allclose(out_bf16mxu, ref, atol=2e-2, rtol=2e-2), "bf16-MXU mismatch vs reference"

    # bf16 activations end-to-end (halves HBM read+write traffic in the mem-bound regime).
    out_bf16 = jax.block_until_ready(
        patch_projection(x.astype(jnp.bfloat16), gamma, beta, weight, (H, W)))
    assert out_bf16.dtype == jnp.bfloat16
    assert jnp.allclose(out_bf16.astype(jnp.float32), ref, atol=3e-2, rtol=3e-2), \
        "bf16-IO mismatch vs reference"

    print("KERNEL_OK")
</pallas_src>

<mosaic_0001>
module attributes {stable_mosaic.version = 11 : i64} {
  func.func @_merge_ln_project_kernel(%arg0: i32, %arg1: memref<4x2x8x64xf32, #tpu.memory_space<vmem>>, %arg2: memref<2x64x64xf32, #tpu.memory_space<vmem>>, %arg3: memref<1x64xf32, #tpu.memory_space<vmem>>, %arg4: memref<1x64xf32, #tpu.memory_space<vmem>>, %arg5: memref<32x64xf32, #tpu.memory_space<vmem>>) attributes {dimension_semantics = [#tpu.dimension_semantics<parallel>], iteration_bounds = array<i64: 4>, scalar_prefetch = 0 : i64, scratch_operands = 0 : i64, tpu.core_type = #tpu.core_type<tc>, window_params = [{transform_indices = @transform_0, window_bounds = array<i64: 4, 2, 8, 64>}, {pipeline_mode = #tpu.pipeline_mode<synchronous>, transform_indices = @transform_1, window_bounds = array<i64: 2, 64, 64>}, {pipeline_mode = #tpu.pipeline_mode<synchronous>, transform_indices = @transform_2, window_bounds = array<i64: 1, 64>}, {pipeline_mode = #tpu.pipeline_mode<synchronous>, transform_indices = @transform_3, window_bounds = array<i64: 1, 64>}, {transform_indices = @transform_4, window_bounds = array<i64: 32, 64>}]} {
    %c0 = arith.constant 0 : index
    %c0_0 = arith.constant 0 : index
    %c0_1 = arith.constant 0 : index
    %c0_2 = arith.constant 0 : index
    %0 = vector.load %arg1[%c0, %c0_0, %c0_1, %c0_2] : memref<4x2x8x64xf32, #tpu.memory_space<vmem>>, vector<4x1x8x64xf32>
    %1 = vector.shape_cast %0 : vector<4x1x8x64xf32> to vector<4x8x64xf32>
    %2 = vector.shape_cast %1 : vector<4x8x64xf32> to vector<32x64xf32>
    %c0_3 = arith.constant 0 : index
    %c1 = arith.constant 1 : index
    %c0_4 = arith.constant 0 : index
    %c0_5 = arith.constant 0 : index
    %3 = vector.load %arg1[%c0_3, %c1, %c0_4, %c0_5] : memref<4x2x8x64xf32, #tpu.memory_space<vmem>>, vector<4x1x8x64xf32>
    %4 = vector.shape_cast %3 : vector<4x1x8x64xf32> to vector<4x8x64xf32>
    %5 = vector.shape_cast %4 : vector<4x8x64xf32> to vector<32x64xf32>
    %cst = arith.constant dense<0.000000e+00> : vector<32xf32>
    %6 = vector.multi_reduction <add>, %2, %cst [1] : vector<32x64xf32> to vector<32xf32>
    %7 = vector.shape_cast %6 : vector<32xf32> to vector<32x1xf32>
    %cst_6 = arith.constant dense<0.000000e+00> : vector<32xf32>
    %8 = vector.multi_reduction <add>, %5, %cst_6 [1] : vector<32x64xf32> to vector<32xf32>
    %9 = vector.shape_cast %8 : vector<32xf32> to vector<32x1xf32>
    %10 = arith.addf %7, %9 : vector<32x1xf32>
    %11 = arith.mulf %2, %2 : vector<32x64xf32>
    %cst_7 = arith.constant dense<0.000000e+00> : vector<32xf32>
    %12 = vector.multi_reduction <add>, %11, %cst_7 [1] : vector<32x64xf32> to vector<32xf32>
    %13 = vector.shape_cast %12 : vector<32xf32> to vector<32x1xf32>
    %14 = arith.mulf %5, %5 : vector<32x64xf32>
    %cst_8 = arith.constant dense<0.000000e+00> : vector<32xf32>
    %15 = vector.multi_reduction <add>, %14, %cst_8 [1] : vector<32x64xf32> to vector<32xf32>
    %16 = vector.shape_cast %15 : vector<32xf32> to vector<32x1xf32>
    %17 = arith.addf %13, %16 : vector<32x1xf32>
    %cst_9 = arith.constant 7.812500e-03 : f32
    %18 = vector.broadcast %cst_9 : f32 to vector<32x1xf32>
    %19 = arith.mulf %10, %18 : vector<32x1xf32>
    %cst_10 = arith.constant 7.812500e-03 : f32
    %20 = vector.broadcast %cst_10 : f32 to vector<32x1xf32>
    %21 = arith.mulf %17, %20 : vector<32x1xf32>
    %22 = arith.mulf %19, %19 : vector<32x1xf32>
    %23 = arith.subf %21, %22 : vector<32x1xf32>
    %cst_11 = arith.constant 0.000000e+00 : f32
    %24 = vector.broadcast %cst_11 : f32 to vector<32x1xf32>
    %25 = arith.maximumf %23, %24 : vector<32x1xf32>
    %cst_12 = arith.constant 9.99999974E-6 : f32
    %26 = vector.broadcast %cst_12 : f32 to vector<32x1xf32>
    %27 = arith.addf %25, %26 : vector<32x1xf32>
    %28 = math.rsqrt %27 : vector<32x1xf32>
    %c0_13 = arith.constant 0 : index
    %c0_14 = arith.constant 0 : index
    %c0_15 = arith.constant 0 : index
    %29 = vector.load %arg2[%c0_13, %c0_14, %c0_15] : memref<2x64x64xf32, #tpu.memory_space<vmem>>, vector<1x64x64xf32>
    %30 = vector.shape_cast %29 : vector<1x64x64xf32> to vector<64x64xf32>
    %cst_16 = arith.constant dense<0.000000e+00> : vector<32x64xf32>
    %31 = tpu.matmul %2, %30, %cst_16 {dimension_numbers = #tpu.dot_dimension_numbers<[1], [0], [0], [1], [0, 0, 1, 1], [], []>} : vector<32x64xf32>, vector<64x64xf32>, vector<32x64xf32> -> vector<32x64xf32>
    %c1_17 = arith.constant 1 : index
    %c0_18 = arith.constant 0 : index
    %c0_19 = arith.constant 0 : index
    %32 = vector.load %arg2[%c1_17, %c0_18, %c0_19] : memref<2x64x64xf32, #tpu.memory_space<vmem>>, vector<1x64x64xf32>
    %33 = vector.shape_cast %32 : vector<1x64x64xf32> to vector<64x64xf32>
    %cst_20 = arith.constant dense<0.000000e+00> : vector<32x64xf32>
    %34 = tpu.matmul %5, %33, %cst_20 {dimension_numbers = #tpu.dot_dimension_numbers<[1], [0], [0], [1], [0, 0, 1, 1], [], []>} : vector<32x64xf32>, vector<64x64xf32>, vector<32x64xf32> -> vector<32x64xf32>
    %35 = arith.addf %31, %34 : vector<32x64xf32>
    %c0_21 = arith.constant 0 : index
    %c0_22 = arith.constant 0 : index
    %36 = vector.load %arg3[%c0_21, %c0_22] : memref<1x64xf32, #tpu.memory_space<vmem>>, vector<1x64xf32>
    %37 = vector.broadcast %19 : vector<32x1xf32> to vector<32x64xf32>
    %38 = vector.broadcast %36 : vector<1x64xf32> to vector<32x64xf32>
    %39 = arith.mulf %37, %38 : vector<32x64xf32>
    %40 = arith.subf %35, %39 : vector<32x64xf32>
    %41 = vector.broadcast %28 : vector<32x1xf32> to vector<32x64xf32>
    %42 = arith.mulf %40, %41 : vector<32x64xf32>
    %c0_23 = arith.constant 0 : index
    %c0_24 = arith.constant 0 : index
    %43 = vector.load %arg4[%c0_23, %c0_24] : memref<1x64xf32, #tpu.memory_space<vmem>>, vector<1x64xf32>
    %44 = vector.broadcast %43 : vector<1x64xf32> to vector<32x64xf32>
    %45 = arith.addf %42, %44 : vector<32x64xf32>
    %c0_25 = arith.constant 0 : index
    %c0_26 = arith.constant 0 : index
    %46 = vector.load %arg5[%c0_25, %c0_26] : memref<32x64xf32, #tpu.memory_space<vmem>>, vector<32x64xf32>
    tpu.vector_store %arg5[%c0_25, %c0_26], %45 {strides = array<i32>} : memref<32x64xf32, #tpu.memory_space<vmem>>, vector<32x64xf32>,
    return
  }
  func.func @transform_0(%arg0: i32) -> (i32, i32, i32, i32) {
    %c0_i32 = arith.constant 0 : i32
    %c0_i32_0 = arith.constant 0 : i32
    %c0_i32_1 = arith.constant 0 : i32
    %c0_i32_2 = arith.constant 0 : i32
    return %arg0, %c0_i32, %c0_i32_0, %c0_i32_1 : i32, i32, i32, i32
  }
  func.func @transform_1(%arg0: i32) -> (i32, i32, i32) {
    %c0_i32 = arith.constant 0 : i32
    %c0_i32_0 = arith.constant 0 : i32
    %c0_i32_1 = arith.constant 0 : i32
    %c0_i32_2 = arith.constant 0 : i32
    return %c0_i32, %c0_i32_0, %c0_i32_1 : i32, i32, i32
  }
  func.func @transform_2(%arg0: i32) -> (i32, i32) {
    %c0_i32 = arith.constant 0 : i32
    %c0_i32_0 = arith.constant 0 : i32
    %c0_i32_1 = arith.constant 0 : i32
    return %c0_i32, %c0_i32_0 : i32, i32
  }
  func.func @transform_3(%arg0: i32) -> (i32, i32) {
    %c0_i32 = arith.constant 0 : i32
    %c0_i32_0 = arith.constant 0 : i32
    %c0_i32_1 = arith.constant 0 : i32
    return %c0_i32, %c0_i32_0 : i32, i32
  }
  func.func @transform_4(%arg0: i32) -> (i32, i32) {
    %c0_i32 = arith.constant 0 : i32
    %c0_i32_0 = arith.constant 0 : i32
    return %arg0, %c0_i32 : i32, i32
  }
}

module attributes {stable_mosaic.version = 11 : i64} {
  func.func @_merge_ln_project_kernel(%arg0: i32, %arg1: memref<4x2x8x64xf32, #tpu.memory_space<vmem>>, %arg2: memref<2x64x64xf32, #tpu.memory_space<vmem>>, %arg3: memref<1x64xf32, #tpu.memory_space<vmem>>, %arg4: memref<1x64xf32, #tpu.memory_space<vmem>>, %arg5: memref<32x64xf32, #tpu.memory_space<vmem>>) attributes {dimension_semantics = [#tpu.dimension_semantics<parallel>], iteration_bounds = array<i64: 4>, scalar_prefetch = 0 : i64, scratch_operands = 0 : i64, tpu.core_type = #tpu.core_type<tc>, window_params = [{transform_indices = @transform_0, window_bounds = array<i64: 4, 2, 8, 64>}, {pipeline_mode = #tpu.pipeline_mode<synchronous>, transform_indices = @transform_1, window_bounds = array<i64: 2, 64, 64>}, {pipeline_mode = #tpu.pipeline_mode<synchronous>, transform_indices = @transform_2, window_bounds = array<i64: 1, 64>}, {pipeline_mode = #tpu.pipeline_mode<synchronous>, transform_indices = @transform_3, window_bounds = array<i64: 1, 64>}, {transform_indices = @transform_4, window_bounds = array<i64: 32, 64>}]} {
    %c0 = arith.constant 0 : index
    %c0_0 = arith.constant 0 : index
    %c0_1 = arith.constant 0 : index
    %c0_2 = arith.constant 0 : index
    %0 = vector.load %arg1[%c0, %c0_0, %c0_1, %c0_2] : memref<4x2x8x64xf32, #tpu.memory_space<vmem>>, vector<4x1x8x64xf32>
    %1 = vector.shape_cast %0 : vector<4x1x8x64xf32> to vector<4x8x64xf32>
    %2 = vector.shape_cast %1 : vector<4x8x64xf32> to vector<32x64xf32>
    %c0_3 = arith.constant 0 : index
    %c1 = arith.constant 1 : index
    %c0_4 = arith.constant 0 : index
    %c0_5 = arith.constant 0 : index
    %3 = vector.load %arg1[%c0_3, %c1, %c0_4, %c0_5] : memref<4x2x8x64xf32, #tpu.memory_space<vmem>>, vector<4x1x8x64xf32>
    %4 = vector.shape_cast %3 : vector<4x1x8x64xf32> to vector<4x8x64xf32>
    %5 = vector.shape_cast %4 : vector<4x8x64xf32> to vector<32x64xf32>
    %cst = arith.constant dense<0.000000e+00> : vector<32xf32>
    %6 = vector.multi_reduction <add>, %2, %cst [1] : vector<32x64xf32> to vector<32xf32>
    %7 = vector.shape_cast %6 : vector<32xf32> to vector<32x1xf32>
    %cst_6 = arith.constant dense<0.000000e+00> : vector<32xf32>
    %8 = vector.multi_reduction <add>, %5, %cst_6 [1] : vector<32x64xf32> to vector<32xf32>
    %9 = vector.shape_cast %8 : vector<32xf32> to vector<32x1xf32>
    %10 = arith.addf %7, %9 : vector<32x1xf32>
    %11 = arith.mulf %2, %2 : vector<32x64xf32>
    %cst_7 = arith.constant dense<0.000000e+00> : vector<32xf32>
    %12 = vector.multi_reduction <add>, %11, %cst_7 [1] : vector<32x64xf32> to vector<32xf32>
    %13 = vector.shape_cast %12 : vector<32xf32> to vector<32x1xf32>
    %14 = arith.mulf %5, %5 : vector<32x64xf32>
    %cst_8 = arith.constant dense<0.000000e+00> : vector<32xf32>
    %15 = vector.multi_reduction <add>, %14, %cst_8 [1] : vector<32x64xf32> to vector<32xf32>
    %16 = vector.shape_cast %15 : vector<32xf32> to vector<32x1xf32>
    %17 = arith.addf %13, %16 : vector<32x1xf32>
    %cst_9 = arith.constant 7.812500e-03 : f32
    %18 = vector.broadcast %cst_9 : f32 to vector<32x1xf32>
    %19 = arith.mulf %10, %18 : vector<32x1xf32>
    %cst_10 = arith.constant 7.812500e-03 : f32
    %20 = vector.broadcast %cst_10 : f32 to vector<32x1xf32>
    %21 = arith.mulf %17, %20 : vector<32x1xf32>
    %22 = arith.mulf %19, %19 : vector<32x1xf32>
    %23 = arith.subf %21, %22 : vector<32x1xf32>
    %cst_11 = arith.constant 0.000000e+00 : f32
    %24 = vector.broadcast %cst_11 : f32 to vector<32x1xf32>
    %25 = arith.maximumf %23, %24 : vector<32x1xf32>
    %cst_12 = arith.constant 9.99999974E-6 : f32
    %26 = vector.broadcast %cst_12 : f32 to vector<32x1xf32>
    %27 = arith.addf %25, %26 : vector<32x1xf32>
    %28 = math.rsqrt %27 : vector<32x1xf32>
    %c0_13 = arith.constant 0 : index
    %c0_14 = arith.constant 0 : index
    %c0_15 = arith.constant 0 : index
    %29 = vector.load %arg2[%c0_13, %c0_14, %c0_15] : memref<2x64x64xf32, #tpu.memory_space<vmem>>, vector<1x64x64xf32>
    %30 = vector.shape_cast %29 : vector<1x64x64xf32> to vector<64x64xf32>
    %cst_16 = arith.constant dense<0.000000e+00> : vector<32x64xf32>
    %31 = tpu.matmul %2, %30, %cst_16 {dimension_numbers = #tpu.dot_dimension_numbers<[1], [0], [0], [1], [0, 0, 1, 1], [], []>} : vector<32x64xf32>, vector<64x64xf32>, vector<32x64xf32> -> vector<32x64xf32>
    %c1_17 = arith.constant 1 : index
    %c0_18 = arith.constant 0 : index
    %c0_19 = arith.constant 0 : index
    %32 = vector.load %arg2[%c1_17, %c0_18, %c0_19] : memref<2x64x64xf32, #tpu.memory_space<vmem>>, vector<1x64x64xf32>
    %33 = vector.shape_cast %32 : vector<1x64x64xf32> to vector<64x64xf32>
    %cst_20 = arith.constant dense<0.000000e+00> : vector<32x64xf32>
    %34 = tpu.matmul %5, %33, %cst_20 {dimension_numbers = #tpu.dot_dimension_numbers<[1], [0], [0], [1], [0, 0, 1, 1], [], []>} : vector<32x64xf32>, vector<64x64xf32>, vector<32x64xf32> -> vector<32x64xf32>
    %35 = arith.addf %31, %34 : vector<32x64xf32>
    %c0_21 = arith.constant 0 : index
    %c0_22 = arith.constant 0 : index
    %36 = vector.load %arg3[%c0_21, %c0_22] : memref<1x64xf32, #tpu.memory_space<vmem>>, vector<1x64xf32>
    %37 = vector.broadcast %19 : vector<32x1xf32> to vector<32x64xf32>
    %38 = vector.broadcast %36 : vector<1x64xf32> to vector<32x64xf32>
    %39 = arith.mulf %37, %38 : vector<32x64xf32>
    %40 = arith.subf %35, %39 : vector<32x64xf32>
    %41 = vector.broadcast %28 : vector<32x1xf32> to vector<32x64xf32>
    %42 = arith.mulf %40, %41 : vector<32x64xf32>
    %c0_23 = arith.constant 0 : index
    %c0_24 = arith.constant 0 : index
    %43 = vector.load %arg4[%c0_23, %c0_24] : memref<1x64xf32, #tpu.memory_space<vmem>>, vector<1x64xf32>
    %44 = vector.broadcast %43 : vector<1x64xf32> to vector<32x64xf32>
    %45 = arith.addf %42, %44 : vector<32x64xf32>
    %c0_25 = arith.constant 0 : index
    %c0_26 = arith.constant 0 : index
    %46 = vector.load %arg5[%c0_25, %c0_26] : memref<32x64xf32, #tpu.memory_space<vmem>>, vector<32x64xf32>
    tpu.vector_store %arg5[%c0_25, %c0_26], %45 {strides = array<i32>} : memref<32x64xf32, #tpu.memory_space<vmem>>, vector<32x64xf32>,
    return
  }
  func.func @transform_0(%arg0: i32) -> (i32, i32, i32, i32) {
    %c0_i32 = arith.constant 0 : i32
    %c0_i32_0 = arith.constant 0 : i32
    %c0_i32_1 = arith.constant 0 : i32
    %c0_i32_2 = arith.constant 0 : i32
    return %arg0, %c0_i32, %c0_i32_0, %c0_i32_1 : i32, i32, i32, i32
  }
  func.func @transform_1(%arg0: i32) -> (i32, i32, i32) {
    %c0_i32 = arith.constant 0 : i32
    %c0_i32_0 = arith.constant 0 : i32
    %c0_i32_1 = arith.constant 0 : i32
    %c0_i32_2 = arith.constant 0 : i32
    return %c0_i32, %c0_i32_0, %c0_i32_1 : i32, i32, i32
  }
  func.func @transform_2(%arg0: i32) -> (i32, i32) {
    %c0_i32 = arith.constant 0 : i32
    %c0_i32_0 = arith.constant 0 : i32
    %c0_i32_1 = arith.constant 0 : i32
    return %c0_i32, %c0_i32_0 : i32, i32
  }
  func.func @transform_3(%arg0: i32) -> (i32, i32) {
    %c0_i32 = arith.constant 0 : i32
    %c0_i32_0 = arith.constant 0 : i32
    %c0_i32_1 = arith.constant 0 : i32
    return %c0_i32, %c0_i32_0 : i32, i32
  }
  func.func @transform_4(%arg0: i32) -> (i32, i32) {
    %c0_i32 = arith.constant 0 : i32
    %c0_i32_0 = arith.constant 0 : i32
    return %arg0, %c0_i32 : i32, i32
  }
}

</mosaic_0001>

<llo_original>
// kernel: tpu_custom_call.1
$region0: #{tpu_custom_call.1}
  #allocation0 [shape = 'u32[]', space=smem, size = 0x4, offset = 0x4, fixed_abs, tag = 'smem constant byte address 0x4 - core index']
  #allocation1 [shape = 'u32[72,128]{1,0:T(1,128)}', space=vmem, size = 0x9000, scoped, tag = 'internal scratch']
  %s0 = inlined_call_operand.hbm [shape: f32[16,2,8,64], index: 0, kind: input, shape index: {}]
  %s1 = inlined_call_operand.hbm [shape: f32[2,64,64], index: 1, kind: input, shape index: {}]
  %s2 = inlined_call_operand.vmem [shape: f32[1,64], index: 2, kind: input, shape index: {}]
  %s3 = inlined_call_operand.vmem [shape: f32[1,64], index: 3, kind: input, shape index: {}]
  %s4 = inlined_call_operand.vmem [shape: f32[128,64], index: 4, kind: output, shape index: {}]
  %s5 = sld [smem:[#allocation0]]
  $region57: #{tpu_custom_call.1} parent=0
    _
  %s7 = ssub.s32 1, %s5
  %s8 = scalar_select 0, %s7, %s5
  $region1: #{tpu_custom_call.1} parent=0
    #allocation2 [shape = 'u8[65536]{0}', space=vmem, size = 0x10000, scoped, tag = 'input window, operand 0']
    #allocation3 [shape = 's32[2]{0}', space=sflag, size = 0x8, scoped, tag = 'scoped memory for tpu_custom_call.1']
    #allocation4 [shape = 'u8[65536]{0}', space=vmem, size = 0x10000, scoped, tag = 'input window, operand 1, single buffered']
    #allocation5 [shape = 's32[1]{0}', space=sflag, size = 0x4, scoped, tag = 'scoped memory for tpu_custom_call.1']
    %9 = vsyncpa [#allocation3], 0
    %s10 = scalar_lea.sflag [#allocation3], 1
    %11 = vsyncpa %s10, 0
    %12 = vsyncpa [#allocation5], 0
    loop: start=0, step=1, limit=6
    $region2: #{tpu_custom_call.1} parent=1 // loop_pre_header
      _
    $region3: #{tpu_custom_call.1} parent=1 // loop_header
      %s14 = sphi 0, %s18
      %p15 = scmp.ge.s32.totalorder %s14, 6
      %s24 = sphi 0, %s26
      %s27 = sphi 0, %s24
      %s28 = sphi 0, %s27
      %s44 = sphi 0, %s28
      %s48 = sphi 0, %s48
      %s50 = sphi 0, %s48
      %s51 = sphi 0, %s50
      %s65 = sphi 0, %s51
      %s69 = sphi 0, %s69
      %s71 = sphi 0, %s69
      %s72 = sphi 0, %s71
      %s86 = sphi 0, %s72
      %s90 = sphi 0, %s90
      %s92 = sphi 0, %s90
      %s93 = sphi 0, %s92
      %s107 = sphi 0, %s93
      %s113 = sphi 0, %s115
      %s116 = sphi 0, %s113
      %s117 = sphi 0, %s116
      %s133 = sphi 0, %s117
    $region4: #{tpu_custom_call.1} parent=1 // loop_header_branch
      %17 = sbr.rel (%p15) target = $region8
    $region5: #{tpu_custom_call.1} parent=1 // loop_body
      %s19 = ssub.s32 %s14, 1
      %s20 = ssub.s32 %s14, 2
      %s21 = sadd.s32 %s14, 1
      %s22 = ssub.s32 %s14, %s21
      %p23 = scmp.eq.s32.totalorder %s22, 0
      %s25 = sadd.s32 %s24, 1
      %s26 = scalar_select %p23, %s24, %s25
      %p29 = pneg %p23
      %p30 = scmp.eq.s32.totalorder %s14, 3
      %p31 = por %p29, %p30
      %p32 = scmp.ne.s32.totalorder %s24, %s27
      %p33 = scmp.eq.s32.totalorder %s14, 0
      %p34 = por %p32, %p33
      %p35 = scmp.ne.s32.totalorder %s24, %s27
      %p36 = scmp.eq.s32.totalorder %s19, 3
      %p37 = por %p35, %p36
      %p38 = scmp.ne.s32.totalorder %s27, %s28
      %p39 = scmp.eq.s32.totalorder %s19, 0
      %p40 = por %p38, %p39
      %p41 = scmp.ne.s32.totalorder %s27, %s28
      %p42 = scmp.eq.s32.totalorder %s20, 3
      %p43 = por %p41, %p42
      %p45 = scmp.ne.s32.totalorder %s28, %s44
      %p46 = scmp.eq.s32.totalorder %s20, 0
      %p47 = por %p45, %p46
      %s49 = sadd.s32 %s48, 1
      %p52 = scmp.eq.s32.totalorder %s14, 3
      %p53 = scmp.ne.s32.totalorder %s48, %s50
      %p54 = scmp.eq.s32.totalorder %s14, 0
      %p55 = por %p53, %p54
      %p56 = scmp.ne.s32.totalorder %s48, %s50
      %p57 = scmp.eq.s32.totalorder %s19, 3
      %p58 = por %p56, %p57
      %p59 = scmp.ne.s32.totalorder %s50, %s51
      %p60 = scmp.eq.s32.totalorder %s19, 0
      %p61 = por %p59, %p60
      %p62 = scmp.ne.s32.totalorder %s50, %s51
      %p63 = scmp.eq.s32.totalorder %s20, 3
      %p64 = por %p62, %p63
      %p66 = scmp.ne.s32.totalorder %s51, %s65
      %p67 = scmp.eq.s32.totalorder %s20, 0
      %p68 = por %p66, %p67
      %s70 = sadd.s32 %s69, 1
      %p73 = scmp.eq.s32.totalorder %s14, 3
      %p74 = scmp.ne.s32.totalorder %s69, %s71
      %p75 = scmp.eq.s32.totalorder %s14, 0
      %p76 = por %p74, %p75
      %p77 = scmp.ne.s32.totalorder %s69, %s71
      %p78 = scmp.eq.s32.totalorder %s19, 3
      %p79 = por %p77, %p78
      %p80 = scmp.ne.s32.totalorder %s71, %s72
      %p81 = scmp.eq.s32.totalorder %s19, 0
      %p82 = por %p80, %p81
      %p83 = scmp.ne.s32.totalorder %s71, %s72
      %p84 = scmp.eq.s32.totalorder %s20, 3
      %p85 = por %p83, %p84
      %p87 = scmp.ne.s32.totalorder %s72, %s86
      %p88 = scmp.eq.s32.totalorder %s20, 0
      %p89 = por %p87, %p88
      %s91 = sadd.s32 %s90, 1
      %p94 = scmp.eq.s32.totalorder %s14, 3
      %p95 = scmp.ne.s32.totalorder %s90, %s92
      %p96 = scmp.eq.s32.totalorder %s14, 0
      %p97 = por %p95, %p96
      %p98 = scmp.ne.s32.totalorder %s90, %s92
      %p99 = scmp.eq.s32.totalorder %s19, 3
      %p100 = por %p98, %p99
      %p101 = scmp.ne.s32.totalorder %s92, %s93
      %p102 = scmp.eq.s32.totalorder %s19, 0
      %p103 = por %p101, %p102
      %p104 = scmp.ne.s32.totalorder %s92, %s93
      %p105 = scmp.eq.s32.totalorder %s20, 3
      %p106 = por %p104, %p105
      %p108 = scmp.ne.s32.totalorder %s93, %s107
      %p109 = scmp.eq.s32.totalorder %s20, 0
      %p110 = por %p108, %p109
      %s111 = ssub.s32 %s14, %s21
      %p112 = scmp.eq.s32.totalorder %s111, 0
      %s114 = sadd.s32 %s113, 1
      %s115 = scalar_select %p112, %s113, %s114
      %p118 = pneg %p112
      %p119 = scmp.eq.s32.totalorder %s14, 3
      %p120 = por %p118, %p119
      %p121 = scmp.ne.s32.totalorder %s113, %s116
      %p122 = scmp.eq.s32.totalorder %s14, 0
      %p123 = por %p121, %p122
      %p124 = scmp.ne.s32.totalorder %s113, %s116
      %p125 = scmp.eq.s32.totalorder %s19, 3
      %p126 = por %p124, %p125
      %p127 = scmp.ne.s32.totalorder %s116, %s117
      %p128 = scmp.eq.s32.totalorder %s19, 0
      %p129 = por %p127, %p128
      %p130 = scmp.ne.s32.totalorder %s116, %s117
      %p131 = scmp.eq.s32.totalorder %s20, 3
      %p132 = por %p130, %p131
      %p134 = scmp.ne.s32.totalorder %s117, %s133
      %p135 = scmp.eq.s32.totalorder %s20, 0
      %p136 = por %p134, %p135
      %p137 = scmp.le.s32.totalorder 1, %s14
      %p138 = scmp.lt.s32.totalorder %s14, 5
      %p139 = pnand %p137, %p138
      %p140 = pneg %p139
      // Predicated region
      $region9: #{tpu_custom_call.1} parent=5 // pred_check
        _
      $region10: #{tpu_custom_call.1} parent=5 // pred_check_branch
        %142 = sbr.rel (%p139) target = $region12
      $region11: #{tpu_custom_call.1} parent=5 // pred_region
        %s143 = ssub.s32 %s14, 1
        // Predicated region
        $region13: #{tpu_custom_call.1} parent=11 // pred_check
          %p144 = pneg %p61
        $region14: #{tpu_custom_call.1} parent=11 // pred_check_branch
          %146 = sbr.rel (%p144) target = $region16
        $region15: #{tpu_custom_call.1} parent=11 // pred_region
          %148 = vsyncadd [#allocation5], 0
          %s149 = sshll.u32 %s1, 4
          %s150 = int_to_ptr.hbm [resolvable:$true] %s149
          %s151 = sshll.u32 [#allocation4], 4
          %s152 = int_to_ptr.vmem [resolvable:$true] %s151
          %157 = dma.hbm_to_vmem [thread:$0]  %s150, 2048, %s152, [#allocation5], 128, 128, 8
        $region16: #{tpu_custom_call.1} parent=11 // pred_fallthru
          _
        // Predicated region
        $region17: #{tpu_custom_call.1} parent=11 // pred_check
          %p158 = pneg %p82
        $region18: #{tpu_custom_call.1} parent=11 // pred_check_branch
          %160 = sbr.rel (%p158) target = $region20
        $region19: #{tpu_custom_call.1} parent=11 // pred_region
          _
        $region20: #{tpu_custom_call.1} parent=11 // pred_fallthru
          _
        // Predicated region
        $region21: #{tpu_custom_call.1} parent=11 // pred_check
          %p161 = pneg %p103
        $region22: #{tpu_custom_call.1} parent=11 // pred_check_branch
          %163 = sbr.rel (%p161) target = $region24
        $region23: #{tpu_custom_call.1} parent=11 // pred_region
          _
        $region24: #{tpu_custom_call.1} parent=11 // pred_fallthru
          _
      $region12: #{tpu_custom_call.1} parent=5 // pred_fallthru
        _
      %p164 = scmp.lt.s32.totalorder %s14, 4
      // Predicated region
      $region25: #{tpu_custom_call.1} parent=5 // pred_check
        %p165 = pneg %p164
      $region26: #{tpu_custom_call.1} parent=5 // pred_check_branch
        %167 = sbr.rel (%p165) target = $region28
      $region27: #{tpu_custom_call.1} parent=5 // pred_region
        // Predicated region
        $region29: #{tpu_custom_call.1} parent=27 // pred_check
          %p168 = pneg %p34
        $region30: #{tpu_custom_call.1} parent=27 // pred_check_branch
          %170 = sbr.rel (%p168) target = $region32
        $region31: #{tpu_custom_call.1} parent=27 // pred_region
          %s171 = sand.u32 %s24, 1
          %s172 = scalar_lea.sflag [#allocation3], %s171
          %s173 = sand.u32 %s24, 1
          %s174 = smul.addr %s173, 64
          %s175 = scalar_lea.vmem [#allocation2], %s174
          %s176 = smul.u32 4, %s14
          %178 = vsyncadd %s172, 0
          %s179 = smul.addr %s176, 2
          %s180 = smul.addr %s179, 8
          %s181 = scalar_lea.hbm %s0, %s180
          %s182 = sshll.u32 %s181, 4
          %s183 = int_to_ptr.hbm [resolvable:$true] %s182
          %s184 = sshll.u32 %s175, 4
          %s185 = int_to_ptr.vmem [resolvable:$true] %s184
          %190 = dma.hbm_to_vmem [thread:$0]  %s183, 1024, %s185, %s172, 128, 128, 8
        $region32: #{tpu_custom_call.1} parent=27 // pred_fallthru
          _
      $region28: #{tpu_custom_call.1} parent=5 // pred_fallthru
        _
      %p191 = scmp.le.s32.totalorder 1, %s14
      %p192 = scmp.lt.s32.totalorder %s14, 5
      %p193 = pnand %p191, %p192
      %p194 = pneg %p193
      // Predicated region
      $region33: #{tpu_custom_call.1} parent=5 // pred_check
        _
      $region34: #{tpu_custom_call.1} parent=5 // pred_check_branch
        %196 = sbr.rel (%p193) target = $region36
      $region35: #{tpu_custom_call.1} parent=5 // pred_region
        %s197 = ssub.s32 %s14, 1
        %s198 = sand.u32 %s27, 1
        %s199 = scalar_lea.sflag [#allocation3], %s198
        %s200 = sand.u32 %s27, 1
        %s201 = smul.addr %s200, 64
        %s202 = scalar_lea.vmem [#allocation2], %s201
        // Predicated region
        $region37: #{tpu_custom_call.1} parent=35 // pred_check
          %p203 = pneg %p40
        $region38: #{tpu_custom_call.1} parent=35 // pred_check_branch
          %205 = sbr.rel (%p203) target = $region40
        $region39: #{tpu_custom_call.1} parent=35 // pred_region
          %207 = dma.done %s199, 1024
        $region40: #{tpu_custom_call.1} parent=35 // pred_fallthru
          _
        // Predicated region
        $region41: #{tpu_custom_call.1} parent=35 // pred_check
          %p208 = pneg %p61
        $region42: #{tpu_custom_call.1} parent=35 // pred_check_branch
          %210 = sbr.rel (%p208) target = $region44
        $region43: #{tpu_custom_call.1} parent=35 // pred_region
          %212 = dma.done [#allocation5], 2048
        $region44: #{tpu_custom_call.1} parent=35 // pred_fallthru
          _
        %s213 = sand.u32 %s27, 1
        %s214 = scalar_lea.sflag [#allocation3], %s213
        %s215 = sand.u32 %s27, 1
        %s216 = smul.addr %s215, 64
        %s217 = scalar_lea.vmem [#allocation2], %s216
        %p218 = pneg %p40
        %p219 = pneg %p37
        %p220 = pneg %p61
        %p221 = pneg %p58
        %p222 = pneg %p82
        %p223 = pneg %p79
        %p224 = pneg %p103
        %p225 = pneg %p100
        %p226 = pneg %p129
        %p227 = pneg %p126
        %s228 = smul.u32 4, %s19
        %p229 = scmp.lt.s32.totalorder %s228, 15
        %s230 = scalar_select %p229, %s228, 15
        %s231 = smul.addr %s230, 8
        %s232 = scalar_lea.vmem %s4, %s231
        %s233 = smul.u32 4, %s19
        %s234 = smul.u32 4, %s19
        %p235 = scmp.lt.s32.totalorder %s234, 15
        %s236 = scalar_select %p235, %s234, 15
        %s237 = smul.addr %s236, 8
        %s238 = scalar_lea.vmem %s4, %s237
        %s239 = smul.u32 4, %s19
        %v240 = vld [vmem:[%s202] sm:$0xff]
        %v241 = vld [vmem:[%s202 + $0x10] sm:$0xff]
        %v242 = vld [vmem:[%s202 + $0x20] sm:$0xff]
        %v243 = vld [vmem:[%s202 + $0x30] sm:$0xff]
        %s244 = scalar_lea.vmem %s202, 8 [#allocation2]
        %v245 = vld [vmem:[%s244] sm:$0xff]
        %v246 = vld [vmem:[%s244 + $0x10] sm:$0xff]
        %v247 = vld [vmem:[%s244 + $0x20] sm:$0xff]
        %v248 = vld [vmem:[%s244 + $0x30] sm:$0xff]
        %vm249 = vcmask 523264
        %v250 = vsel %vm249, %v240, 0.0
        %251 = vadd.xlane.f32.xlu0 %v250
        %v252 = vpop.xlane.xlu0 %251
        %v253 = vsel %vm249, %v241, 0.0
        %254 = vadd.xlane.f32.xlu0 %v253
        %v255 = vpop.xlane.xlu0 %254
        %v256 = vsel %vm249, %v242, 0.0
        %257 = vadd.xlane.f32.xlu0 %v256
        %v258 = vpop.xlane.xlu0 %257
        %v259 = vsel %vm249, %v243, 0.0
        %260 = vadd.xlane.f32.xlu0 %v259
        %v261 = vpop.xlane.xlu0 %260
        %v262 = vsel %vm249, %v245, 0.0
        %263 = vadd.xlane.f32.xlu0 %v262
        %v264 = vpop.xlane.xlu0 %263
        %v265 = vsel %vm249, %v246, 0.0
        %266 = vadd.xlane.f32.xlu0 %v265
        %v267 = vpop.xlane.xlu0 %266
        %v268 = vsel %vm249, %v247, 0.0
        %269 = vadd.xlane.f32.xlu0 %v268
        %v270 = vpop.xlane.xlu0 %269
        %v271 = vsel %vm249, %v248, 0.0
        %272 = vadd.xlane.f32.xlu0 %v271
        %v273 = vpop.xlane.xlu0 %272
        %v274 = vadd.f32 %v252, %v264
        %v275 = vadd.f32 %v255, %v267
        %v276 = vadd.f32 %v258, %v270
        %v277 = vadd.f32 %v261, %v273
        %v278 = vmul.f32 %v240, %v240
        %v279 = vmul.f32 %v241, %v241
        %v280 = vmul.f32 %v242, %v242
        %v281 = vmul.f32 %v243, %v243
        %v282 = vsel %vm249, %v278, 0.0
        %283 = vadd.xlane.f32.xlu0 %v282
        %v284 = vpop.xlane.xlu0 %283
        %v285 = vsel %vm249, %v279, 0.0
        %286 = vadd.xlane.f32.xlu0 %v285
        %v287 = vpop.xlane.xlu0 %286
        %v288 = vsel %vm249, %v280, 0.0
        %289 = vadd.xlane.f32.xlu0 %v288
        %v290 = vpop.xlane.xlu0 %289
        %v291 = vsel %vm249, %v281, 0.0
        %292 = vadd.xlane.f32.xlu0 %v291
        %v293 = vpop.xlane.xlu0 %292
        %v294 = vmul.f32 %v245, %v245
        %v295 = vmul.f32 %v246, %v246
        %v296 = vmul.f32 %v247, %v247
        %v297 = vmul.f32 %v248, %v248
        %v298 = vsel %vm249, %v294, 0.0
        %299 = vadd.xlane.f32.xlu0 %v298
        %v300 = vpop.xlane.xlu0 %299
        %v301 = vsel %vm249, %v295, 0.0
        %302 = vadd.xlane.f32.xlu0 %v301
        %v303 = vpop.xlane.xlu0 %302
        %v304 = vsel %vm249, %v296, 0.0
        %305 = vadd.xlane.f32.xlu0 %v304
        %v306 = vpop.xlane.xlu0 %305
        %v307 = vsel %vm249, %v297, 0.0
        %308 = vadd.xlane.f32.xlu0 %v307
        %v309 = vpop.xlane.xlu0 %308
        %v310 = vadd.f32 %v284, %v300
        %v311 = vadd.f32 %v287, %v303
        %v312 = vadd.f32 %v290, %v306
        %v313 = vadd.f32 %v293, %v309
        %v314 = vmul.f32 %v274, 0.0078125
        %v315 = vmul.f32 %v275, 0.0078125
        %v316 = vmul.f32 %v276, 0.0078125
        %v317 = vmul.f32 %v277, 0.0078125
        %v318 = vmul.f32 %v310, 0.0078125
        %v319 = vmul.f32 %v311, 0.0078125
        %v320 = vmul.f32 %v312, 0.0078125
        %v321 = vmul.f32 %v313, 0.0078125
        %v322 = vmul.f32 %v314, %v314
        %v323 = vmul.f32 %v315, %v315
        %v324 = vmul.f32 %v316, %v316
        %v325 = vmul.f32 %v317, %v317
        %v326 = vsub.f32 %v318, %v322
        %v327 = vsub.f32 %v319, %v323
        %v328 = vsub.f32 %v320, %v324
        %v329 = vsub.f32 %v321, %v325
        %v330 = vmax.f32 %v326, 0.0
        %v331 = vmax.f32 %v327, 0.0
        %v332 = vmax.f32 %v328, 0.0
        %v333 = vmax.f32 %v329, 0.0
        %v334 = vadd.f32 %v330, 1e-05
        %v335 = vadd.f32 %v331, 1e-05
        %v336 = vadd.f32 %v332, 1e-05
        %v337 = vadd.f32 %v333, 1e-05
        %v338 = vrsqrt.pop %v334
        %v339 = vmul.f32 %v338, %v334
        %v340 = vmul.f32 %v339, %v338
        %v341 = vmul.f32 0.5, %v340
        %v342 = vsub.f32 1.5, %v341
        %v343 = vmul.f32 %v338, %v342
        %vm344 = vweird.f32 %v334
        %vm345 = vweird.f32 %v338
        %vm346 = vmor %vm344, %vm345
        %v347 = vsel %vm346, %v338, %v343
        %v348 = vrsqrt.pop %v335
        %v349 = vmul.f32 %v348, %v335
        %v350 = vmul.f32 %v349, %v348
        %v351 = vmul.f32 0.5, %v350
        %v352 = vsub.f32 1.5, %v351
        %v353 = vmul.f32 %v348, %v352
        %vm354 = vweird.f32 %v335
        %vm355 = vweird.f32 %v348
        %vm356 = vmor %vm354, %vm355
        %v357 = vsel %vm356, %v348, %v353
        %v358 = vrsqrt.pop %v336
        %v359 = vmul.f32 %v358, %v336
        %v360 = vmul.f32 %v359, %v358
        %v361 = vmul.f32 0.5, %v360
        %v362 = vsub.f32 1.5, %v361
        %v363 = vmul.f32 %v358, %v362
        %vm364 = vweird.f32 %v336
        %vm365 = vweird.f32 %v358
        %vm366 = vmor %vm364, %vm365
        %v367 = vsel %vm366, %v358, %v363
        %v368 = vrsqrt.pop %v337
        %v369 = vmul.f32 %v368, %v337
        %v370 = vmul.f32 %v369, %v368
        %v371 = vmul.f32 0.5, %v370
        %v372 = vsub.f32 1.5, %v371
        %v373 = vmul.f32 %v368, %v372
        %vm374 = vweird.f32 %v337
        %vm375 = vweird.f32 %v368
        %vm376 = vmor %vm374, %vm375
        %v377 = vsel %vm376, %v368, %v373
        %v378 = vld [vmem:[#allocation4] sm:$0xff]
        %v379 = vld [vmem:[#allocation4 + $0x8] sm:$0xff]
        %v380 = vld [vmem:[#allocation4 + $0x10] sm:$0xff]
        %v381 = vld [vmem:[#allocation4 + $0x18] sm:$0xff]
        %v382 = vld [vmem:[#allocation4 + $0x20] sm:$0xff]
        %v383 = vld [vmem:[#allocation4 + $0x28] sm:$0xff]
        %v384 = vld [vmem:[#allocation4 + $0x30] sm:$0xff]
        %v385 = vld [vmem:[#allocation4 + $0x38] sm:$0xff]
        %s386 = scalar_lea.vmem [#allocation4], 64
        %v387 = vld [vmem:[%s386] sm:$0xff]
        %v388 = vld [vmem:[%s386 + $0x8] sm:$0xff]
        %v389 = vld [vmem:[%s386 + $0x10] sm:$0xff]
        %v390 = vld [vmem:[%s386 + $0x18] sm:$0xff]
        %v391 = vld [vmem:[%s386 + $0x20] sm:$0xff]
        %v392 = vld [vmem:[%s386 + $0x28] sm:$0xff]
        %v393 = vld [vmem:[%s386 + $0x30] sm:$0xff]
        %v394 = vld [vmem:[%s386 + $0x38] sm:$0xff]
        %v396 = vsel %vm249, %v245, 0
        %v399 = vsel %vm249, %v246, 0
        %v402 = vsel %vm249, %v247, 0
        %v405 = vsel %vm249, %v248, 0
        %407 = vmatpush.msra.mxu0 0.0
        %408 = vmatpush.msra.mxu0 0.0
        %409 = vmatpush.msra.mxu0 0.0
        %410 = vmatpush.msra.mxu0 0.0
        %411 = vmatpush.msra.mxu0 0.0
        %412 = vmatpush.msra.mxu0 0.0
        %413 = vmatpush.msra.mxu0 0.0
        %414 = vmatpush.msra.mxu0 0.0
        %415 = vmatpush.msra.mxu0 %v394
        %416 = vmatpush.msra.mxu0 %v393
        %417 = vmatpush.msra.mxu0 %v392
        %418 = vmatpush.msra.mxu0 %v391
        %419 = vmatpush.msra.mxu0 %v390
        %420 = vmatpush.msra.mxu0 %v389
        %421 = vmatpush.msra.mxu0 %v388
        %422 = vmatpush.msra.mxu0 %v387
        %423 = vmatmul.f32.gmra.mxu0 %v396
        %v424 = vpop.f32.mrf.mxu0
        %v425 = vadd.f32 0.0, %v424
        %426 = vmatmul.f32.gmra.mxu0 %v399
        %v427 = vpop.f32.mrf.mxu0
        %v428 = vadd.f32 0.0, %v427
        %429 = vmatmul.f32.gmra.mxu0 %v402
        %v430 = vpop.f32.mrf.mxu0
        %v431 = vadd.f32 0.0, %v430
        %432 = vmatmul.f32.gmra.mxu0 %v405
        %v433 = vpop.f32.mrf.mxu0
        %v434 = vadd.f32 0.0, %v433
        %435 = vdwg.mxu0
        %v437 = vsel %vm249, %v240, 0
        %v440 = vsel %vm249, %v241, 0
        %v443 = vsel %vm249, %v242, 0
        %v446 = vsel %vm249, %v243, 0
        %448 = vmatpush.msra.mxu0 0.0
        %449 = vmatpush.msra.mxu0 0.0
        %450 = vmatpush.msra.mxu0 0.0
        %451 = vmatpush.msra.mxu0 0.0
        %452 = vmatpush.msra.mxu0 0.0
        %453 = vmatpush.msra.mxu0 0.0
        %454 = vmatpush.msra.mxu0 0.0
        %455 = vmatpush.msra.mxu0 0.0
        %456 = vmatpush.msra.mxu0 %v385
        %457 = vmatpush.msra.mxu0 %v384
        %458 = vmatpush.msra.mxu0 %v383
        %459 = vmatpush.msra.mxu0 %v382
        %460 = vmatpush.msra.mxu0 %v381
        %461 = vmatpush.msra.mxu0 %v380
        %462 = vmatpush.msra.mxu0 %v379
        %463 = vmatpush.msra.mxu0 %v378
        %464 = vmatmul.f32.gmra.mxu0 %v437
        %v465 = vpop.f32.mrf.mxu0
        %v466 = vadd.f32 %v425, %v465
        %467 = vmatmul.f32.gmra.mxu0 %v440
        %v468 = vpop.f32.mrf.mxu0
        %v469 = vadd.f32 %v428, %v468
        %470 = vmatmul.f32.gmra.mxu0 %v443
        %v471 = vpop.f32.mrf.mxu0
        %v472 = vadd.f32 %v431, %v471
        %473 = vmatmul.f32.gmra.mxu0 %v446
        %v474 = vpop.f32.mrf.mxu0
        %v475 = vadd.f32 %v434, %v474
        %476 = vdwg.mxu0
        %v477 = vld [vmem:[%s2] sm:$0x1]
        %v479 = vperm.slane %v477, 0
        %v481 = vmul.f32 %v314, %v479
        %v482 = vmul.f32 %v315, %v479
        %v483 = vmul.f32 %v316, %v479
        %v484 = vmul.f32 %v317, %v479
        %v485 = vsub.f32 %v466, %v481
        %v486 = vsub.f32 %v469, %v482
        %v487 = vsub.f32 %v472, %v483
        %v488 = vsub.f32 %v475, %v484
        %v489 = vmul.f32 %v485, %v347
        %v490 = vmul.f32 %v486, %v357
        %v491 = vmul.f32 %v487, %v367
        %v492 = vmul.f32 %v488, %v377
        %v493 = vld [vmem:[%s3] sm:$0x1]
        %v495 = vperm.slane %v493, 0
        %v497 = vadd.f32 %v489, %v495
        %v498 = vadd.f32 %v490, %v495
        %v499 = vadd.f32 %v491, %v495
        %v500 = vadd.f32 %v492, %v495
        %501 = vst.msk [vmem:[%s238] sm:$0xff] %vm249, %v497
        %502 = vst.msk [vmem:[%s238 + $0x8] sm:$0xff] %vm249, %v498
        %503 = vst.msk [vmem:[%s238 + $0x10] sm:$0xff] %vm249, %v499
        %504 = vst.msk [vmem:[%s238 + $0x18] sm:$0xff] %vm249, %v500
        %s505 = smul.u32 4, %s19
        %p506 = scmp.lt.s32.totalorder %s505, 15
        %s507 = scalar_select %p506, %s505, 15
        %s508 = smul.addr %s507, 8
        %s509 = scalar_lea.vmem %s4, %s508
        // Predicated region
        $region45: #{tpu_custom_call.1} parent=35 // pred_check
          %p510 = pneg %p126
        $region46: #{tpu_custom_call.1} parent=35 // pred_check_branch
          %512 = sbr.rel (%p510) target = $region48
        $region47: #{tpu_custom_call.1} parent=35 // pred_region
          %s513 = smul.u32 4, %s19
        $region48: #{tpu_custom_call.1} parent=35 // pred_fallthru
          _
      $region36: #{tpu_custom_call.1} parent=5 // pred_fallthru
        _
      %p514 = scmp.le.s32.totalorder 2, %s14
      // Predicated region
      $region49: #{tpu_custom_call.1} parent=5 // pred_check
        %p515 = pneg %p514
      $region50: #{tpu_custom_call.1} parent=5 // pred_check_branch
        %517 = sbr.rel (%p515) target = $region52
      $region51: #{tpu_custom_call.1} parent=5 // pred_region
        %s518 = ssub.s32 %s14, 2
        // Predicated region
        $region53: #{tpu_custom_call.1} parent=51 // pred_check
          %p519 = pneg %p132
        $region54: #{tpu_custom_call.1} parent=51 // pred_check_branch
          %521 = sbr.rel (%p519) target = $region56
        $region55: #{tpu_custom_call.1} parent=51 // pred_region
          %s522 = smul.u32 4, %s20
          %p523 = scmp.lt.s32.totalorder %s522, 15
          %s524 = scalar_select %p523, %s522, 15
          %s525 = smul.addr %s524, 8
          %s526 = scalar_lea.vmem %s4, %s525
        $region56: #{tpu_custom_call.1} parent=51 // pred_fallthru
          _
      $region52: #{tpu_custom_call.1} parent=5 // pred_fallthru
        _
    $region6: #{tpu_custom_call.1} parent=1 // loop_footer
      %s18 = sadd.s32 1, %s14
    $region7: #{tpu_custom_call.1} parent=1 // loop_footer_branch
      %13 = sbr.rel target = $region3
    $region8: #{tpu_custom_call.1} parent=1 // loop_exit
      _
    %527 = vsyncpa [#allocation3], 1
    %s528 = scalar_lea.sflag [#allocation3], 1
    %529 = vsyncpa %s528, 1
    %530 = vsyncpa [#allocation5], 1

// kernel: tpu_custom_call.1
$region0: #{tpu_custom_call.1}
  #allocation0 [shape = 'u32[]', space=smem, size = 0x4, offset = 0x4, fixed_abs, tag = 'smem constant byte address 0x4 - core index']
  #allocation1 [shape = 'u32[72,128]{1,0:T(1,128)}', space=vmem, size = 0x9000, scoped, tag = 'internal scratch']
  %s0 = inlined_call_operand.hbm [shape: f32[16,2,8,64], index: 0, kind: input, shape index: {}]
  %s1 = inlined_call_operand.hbm [shape: f32[2,64,64], index: 1, kind: input, shape index: {}]
  %s2 = inlined_call_operand.vmem [shape: f32[1,64], index: 2, kind: input, shape index: {}]
  %s3 = inlined_call_operand.vmem [shape: f32[1,64], index: 3, kind: input, shape index: {}]
  %s4 = inlined_call_operand.vmem [shape: f32[128,64], index: 4, kind: output, shape index: {}]
  %s5 = sld [smem:[#allocation0]]
  $region57: #{tpu_custom_call.1} parent=0
    _
  %s7 = ssub.s32 1, %s5
  %s8 = scalar_select 0, %s7, %s5
  $region1: #{tpu_custom_call.1} parent=0
    #allocation2 [shape = 'u8[65536]{0}', space=vmem, size = 0x10000, scoped, tag = 'input window, operand 0']
    #allocation3 [shape = 's32[2]{0}', space=sflag, size = 0x8, scoped, tag = 'scoped memory for tpu_custom_call.1']
    #allocation4 [shape = 'u8[65536]{0}', space=vmem, size = 0x10000, scoped, tag = 'input window, operand 1, single buffered']
    #allocation5 [shape = 's32[1]{0}', space=sflag, size = 0x4, scoped, tag = 'scoped memory for tpu_custom_call.1']
    %9 = vsyncpa [#allocation3], 0
    %s10 = scalar_lea.sflag [#allocation3], 1
    %11 = vsyncpa %s10, 0
    %12 = vsyncpa [#allocation5], 0
    loop: start=0, step=1, limit=6
    $region2: #{tpu_custom_call.1} parent=1 // loop_pre_header
      _
    $region3: #{tpu_custom_call.1} parent=1 // loop_header
      %s14 = sphi 0, %s18
      %p15 = scmp.ge.s32.totalorder %s14, 6
      %s24 = sphi 0, %s26
      %s27 = sphi 0, %s24
      %s28 = sphi 0, %s27
      %s44 = sphi 0, %s28
      %s48 = sphi 0, %s48
      %s50 = sphi 0, %s48
      %s51 = sphi 0, %s50
      %s65 = sphi 0, %s51
      %s69 = sphi 0, %s69
      %s71 = sphi 0, %s69
      %s72 = sphi 0, %s71
      %s86 = sphi 0, %s72
      %s90 = sphi 0, %s90
      %s92 = sphi 0, %s90
      %s93 = sphi 0, %s92
      %s107 = sphi 0, %s93
      %s113 = sphi 0, %s115
      %s116 = sphi 0, %s113
      %s117 = sphi 0, %s116
      %s133 = sphi 0, %s117
    $region4: #{tpu_custom_call.1} parent=1 // loop_header_branch
      %17 = sbr.rel (%p15) target = $region8
    $region5: #{tpu_custom_call.1} parent=1 // loop_body
      %s19 = ssub.s32 %s14, 1
      %s20 = ssub.s32 %s14, 2
      %s21 = sadd.s32 %s14, 1
      %s22 = ssub.s32 %s14, %s21
      %p23 = scmp.eq.s32.totalorder %s22, 0
      %s25 = sadd.s32 %s24, 1
      %s26 = scalar_select %p23, %s24, %s25
      %p29 = pneg %p23
      %p30 = scmp.eq.s32.totalorder %s14, 3
      %p31 = por %p29, %p30
      %p32 = scmp.ne.s32.totalorder %s24, %s27
      %p33 = scmp.eq.s32.totalorder %s14, 0
      %p34 = por %p32, %p33
      %p35 = scmp.ne.s32.totalorder %s24, %s27
      %p36 = scmp.eq.s32.totalorder %s19, 3
      %p37 = por %p35, %p36
      %p38 = scmp.ne.s32.totalorder %s27, %s28
      %p39 = scmp.eq.s32.totalorder %s19, 0
      %p40 = por %p38, %p39
      %p41 = scmp.ne.s32.totalorder %s27, %s28
      %p42 = scmp.eq.s32.totalorder %s20, 3
      %p43 = por %p41, %p42
      %p45 = scmp.ne.s32.totalorder %s28, %s44
      %p46 = scmp.eq.s32.totalorder %s20, 0
      %p47 = por %p45, %p46
      %s49 = sadd.s32 %s48, 1
      %p52 = scmp.eq.s32.totalorder %s14, 3
      %p53 = scmp.ne.s32.totalorder %s48, %s50
      %p54 = scmp.eq.s32.totalorder %s14, 0
      %p55 = por %p53, %p54
      %p56 = scmp.ne.s32.totalorder %s48, %s50
      %p57 = scmp.eq.s32.totalorder %s19, 3
      %p58 = por %p56, %p57
      %p59 = scmp.ne.s32.totalorder %s50, %s51
      %p60 = scmp.eq.s32.totalorder %s19, 0
      %p61 = por %p59, %p60
      %p62 = scmp.ne.s32.totalorder %s50, %s51
      %p63 = scmp.eq.s32.totalorder %s20, 3
      %p64 = por %p62, %p63
      %p66 = scmp.ne.s32.totalorder %s51, %s65
      %p67 = scmp.eq.s32.totalorder %s20, 0
      %p68 = por %p66, %p67
      %s70 = sadd.s32 %s69, 1
      %p73 = scmp.eq.s32.totalorder %s14, 3
      %p74 = scmp.ne.s32.totalorder %s69, %s71
      %p75 = scmp.eq.s32.totalorder %s14, 0
      %p76 = por %p74, %p75
      %p77 = scmp.ne.s32.totalorder %s69, %s71
      %p78 = scmp.eq.s32.totalorder %s19, 3
      %p79 = por %p77, %p78
      %p80 = scmp.ne.s32.totalorder %s71, %s72
      %p81 = scmp.eq.s32.totalorder %s19, 0
      %p82 = por %p80, %p81
      %p83 = scmp.ne.s32.totalorder %s71, %s72
      %p84 = scmp.eq.s32.totalorder %s20, 3
      %p85 = por %p83, %p84
      %p87 = scmp.ne.s32.totalorder %s72, %s86
      %p88 = scmp.eq.s32.totalorder %s20, 0
      %p89 = por %p87, %p88
      %s91 = sadd.s32 %s90, 1
      %p94 = scmp.eq.s32.totalorder %s14, 3
      %p95 = scmp.ne.s32.totalorder %s90, %s92
      %p96 = scmp.eq.s32.totalorder %s14, 0
      %p97 = por %p95, %p96
      %p98 = scmp.ne.s32.totalorder %s90, %s92
      %p99 = scmp.eq.s32.totalorder %s19, 3
      %p100 = por %p98, %p99
      %p101 = scmp.ne.s32.totalorder %s92, %s93
      %p102 = scmp.eq.s32.totalorder %s19, 0
      %p103 = por %p101, %p102
      %p104 = scmp.ne.s32.totalorder %s92, %s93
      %p105 = scmp.eq.s32.totalorder %s20, 3
      %p106 = por %p104, %p105
      %p108 = scmp.ne.s32.totalorder %s93, %s107
      %p109 = scmp.eq.s32.totalorder %s20, 0
      %p110 = por %p108, %p109
      %s111 = ssub.s32 %s14, %s21
      %p112 = scmp.eq.s32.totalorder %s111, 0
      %s114 = sadd.s32 %s113, 1
      %s115 = scalar_select %p112, %s113, %s114
      %p118 = pneg %p112
      %p119 = scmp.eq.s32.totalorder %s14, 3
      %p120 = por %p118, %p119
      %p121 = scmp.ne.s32.totalorder %s113, %s116
      %p122 = scmp.eq.s32.totalorder %s14, 0
      %p123 = por %p121, %p122
      %p124 = scmp.ne.s32.totalorder %s113, %s116
      %p125 = scmp.eq.s32.totalorder %s19, 3
      %p126 = por %p124, %p125
      %p127 = scmp.ne.s32.totalorder %s116, %s117
      %p128 = scmp.eq.s32.totalorder %s19, 0
      %p129 = por %p127, %p128
      %p130 = scmp.ne.s32.totalorder %s116, %s117
      %p131 = scmp.eq.s32.totalorder %s20, 3
      %p132 = por %p130, %p131
      %p134 = scmp.ne.s32.totalorder %s117, %s133
      %p135 = scmp.eq.s32.totalorder %s20, 0
      %p136 = por %p134, %p135
      %p137 = scmp.le.s32.totalorder 1, %s14
      %p138 = scmp.lt.s32.totalorder %s14, 5
      %p139 = pnand %p137, %p138
      %p140 = pneg %p139
      // Predicated region
      $region9: #{tpu_custom_call.1} parent=5 // pred_check
        _
      $region10: #{tpu_custom_call.1} parent=5 // pred_check_branch
        %142 = sbr.rel (%p139) target = $region12
      $region11: #{tpu_custom_call.1} parent=5 // pred_region
        %s143 = ssub.s32 %s14, 1
        // Predicated region
        $region13: #{tpu_custom_call.1} parent=11 // pred_check
          %p144 = pneg %p61
        $region14: #{tpu_custom_call.1} parent=11 // pred_check_branch
          %146 = sbr.rel (%p144) target = $region16
        $region15: #{tpu_custom_call.1} parent=11 // pred_region
          %148 = vsyncadd [#allocation5], 0
          %s149 = sshll.u32 %s1, 4
          %s150 = int_to_ptr.hbm [resolvable:$true] %s149
          %s151 = sshll.u32 [#allocation4], 4
          %s152 = int_to_ptr.vmem [resolvable:$true] %s151
          %157 = dma.hbm_to_vmem [thread:$0]  %s150, 2048, %s152, [#allocation5], 128, 128, 8
        $region16: #{tpu_custom_call.1} parent=11 // pred_fallthru
          _
        // Predicated region
        $region17: #{tpu_custom_call.1} parent=11 // pred_check
          %p158 = pneg %p82
        $region18: #{tpu_custom_call.1} parent=11 // pred_check_branch
          %160 = sbr.rel (%p158) target = $region20
        $region19: #{tpu_custom_call.1} parent=11 // pred_region
          _
        $region20: #{tpu_custom_call.1} parent=11 // pred_fallthru
          _
        // Predicated region
        $region21: #{tpu_custom_call.1} parent=11 // pred_check
          %p161 = pneg %p103
        $region22: #{tpu_custom_call.1} parent=11 // pred_check_branch
          %163 = sbr.rel (%p161) target = $region24
        $region23: #{tpu_custom_call.1} parent=11 // pred_region
          _
        $region24: #{tpu_custom_call.1} parent=11 // pred_fallthru
          _
      $region12: #{tpu_custom_call.1} parent=5 // pred_fallthru
        _
      %p164 = scmp.lt.s32.totalorder %s14, 4
      // Predicated region
      $region25: #{tpu_custom_call.1} parent=5 // pred_check
        %p165 = pneg %p164
      $region26: #{tpu_custom_call.1} parent=5 // pred_check_branch
        %167 = sbr.rel (%p165) target = $region28
      $region27: #{tpu_custom_call.1} parent=5 // pred_region
        // Predicated region
        $region29: #{tpu_custom_call.1} parent=27 // pred_check
          %p168 = pneg %p34
        $region30: #{tpu_custom_call.1} parent=27 // pred_check_branch
          %170 = sbr.rel (%p168) target = $region32
        $region31: #{tpu_custom_call.1} parent=27 // pred_region
          %s171 = sand.u32 %s24, 1
          %s172 = scalar_lea.sflag [#allocation3], %s171
          %s173 = sand.u32 %s24, 1
          %s174 = smul.addr %s173, 64
          %s175 = scalar_lea.vmem [#allocation2], %s174
          %s176 = smul.u32 4, %s14
          %178 = vsyncadd %s172, 0
          %s179 = smul.addr %s176, 2
          %s180 = smul.addr %s179, 8
          %s181 = scalar_lea.hbm %s0, %s180
          %s182 = sshll.u32 %s181, 4
          %s183 = int_to_ptr.hbm [resolvable:$true] %s182
          %s184 = sshll.u32 %s175, 4
          %s185 = int_to_ptr.vmem [resolvable:$true] %s184
          %190 = dma.hbm_to_vmem [thread:$0]  %s183, 1024, %s185, %s172, 128, 128, 8
        $region32: #{tpu_custom_call.1} parent=27 // pred_fallthru
          _
      $region28: #{tpu_custom_call.1} parent=5 // pred_fallthru
        _
      %p191 = scmp.le.s32.totalorder 1, %s14
      %p192 = scmp.lt.s32.totalorder %s14, 5
      %p193 = pnand %p191, %p192
      %p194 = pneg %p193
      // Predicated region
      $region33: #{tpu_custom_call.1} parent=5 // pred_check
        _
      $region34: #{tpu_custom_call.1} parent=5 // pred_check_branch
        %196 = sbr.rel (%p193) target = $region36
      $region35: #{tpu_custom_call.1} parent=5 // pred_region
        %s197 = ssub.s32 %s14, 1
        %s198 = sand.u32 %s27, 1
        %s199 = scalar_lea.sflag [#allocation3], %s198
        %s200 = sand.u32 %s27, 1
        %s201 = smul.addr %s200, 64
        %s202 = scalar_lea.vmem [#allocation2], %s201
        // Predicated region
        $region37: #{tpu_custom_call.1} parent=35 // pred_check
          %p203 = pneg %p40
        $region38: #{tpu_custom_call.1} parent=35 // pred_check_branch
          %205 = sbr.rel (%p203) target = $region40
        $region39: #{tpu_custom_call.1} parent=35 // pred_region
          %207 = dma.done %s199, 1024
        $region40: #{tpu_custom_call.1} parent=35 // pred_fallthru
          _
        // Predicated region
        $region41: #{tpu_custom_call.1} parent=35 // pred_check
          %p208 = pneg %p61
        $region42: #{tpu_custom_call.1} parent=35 // pred_check_branch
          %210 = sbr.rel (%p208) target = $region44
        $region43: #{tpu_custom_call.1} parent=35 // pred_region
          %212 = dma.done [#allocation5], 2048
        $region44: #{tpu_custom_call.1} parent=35 // pred_fallthru
          _
        %s213 = sand.u32 %s27, 1
        %s214 = scalar_lea.sflag [#allocation3], %s213
        %s215 = sand.u32 %s27, 1
        %s216 = smul.addr %s215, 64
        %s217 = scalar_lea.vmem [#allocation2], %s216
        %p218 = pneg %p40
        %p219 = pneg %p37
        %p220 = pneg %p61
        %p221 = pneg %p58
        %p222 = pneg %p82
        %p223 = pneg %p79
        %p224 = pneg %p103
        %p225 = pneg %p100
        %p226 = pneg %p129
        %p227 = pneg %p126
        %s228 = smul.u32 4, %s19
        %p229 = scmp.lt.s32.totalorder %s228, 15
        %s230 = scalar_select %p229, %s228, 15
        %s231 = smul.addr %s230, 8
        %s232 = scalar_lea.vmem %s4, %s231
        %s233 = smul.u32 4, %s19
        %s234 = smul.u32 4, %s19
        %p235 = scmp.lt.s32.totalorder %s234, 15
        %s236 = scalar_select %p235, %s234, 15
        %s237 = smul.addr %s236, 8
        %s238 = scalar_lea.vmem %s4, %s237
        %s239 = smul.u32 4, %s19
        %v240 = vld [vmem:[%s202] sm:$0xff]
        %v241 = vld [vmem:[%s202 + $0x10] sm:$0xff]
        %v242 = vld [vmem:[%s202 + $0x20] sm:$0xff]
        %v243 = vld [vmem:[%s202 + $0x30] sm:$0xff]
        %s244 = scalar_lea.vmem %s202, 8 [#allocation2]
        %v245 = vld [vmem:[%s244] sm:$0xff]
        %v246 = vld [vmem:[%s244 + $0x10] sm:$0xff]
        %v247 = vld [vmem:[%s244 + $0x20] sm:$0xff]
        %v248 = vld [vmem:[%s244 + $0x30] sm:$0xff]
        %vm249 = vcmask 523264
        %v250 = vsel %vm249, %v240, 0.0
        %251 = vadd.xlane.f32.xlu0 %v250
        %v252 = vpop.xlane.xlu0 %251
        %v253 = vsel %vm249, %v241, 0.0
        %254 = vadd.xlane.f32.xlu0 %v253
        %v255 = vpop.xlane.xlu0 %254
        %v256 = vsel %vm249, %v242, 0.0
        %257 = vadd.xlane.f32.xlu0 %v256
        %v258 = vpop.xlane.xlu0 %257
        %v259 = vsel %vm249, %v243, 0.0
        %260 = vadd.xlane.f32.xlu0 %v259
        %v261 = vpop.xlane.xlu0 %260
        %v262 = vsel %vm249, %v245, 0.0
        %263 = vadd.xlane.f32.xlu0 %v262
        %v264 = vpop.xlane.xlu0 %263
        %v265 = vsel %vm249, %v246, 0.0
        %266 = vadd.xlane.f32.xlu0 %v265
        %v267 = vpop.xlane.xlu0 %266
        %v268 = vsel %vm249, %v247, 0.0
        %269 = vadd.xlane.f32.xlu0 %v268
        %v270 = vpop.xlane.xlu0 %269
        %v271 = vsel %vm249, %v248, 0.0
        %272 = vadd.xlane.f32.xlu0 %v271
        %v273 = vpop.xlane.xlu0 %272
        %v274 = vadd.f32 %v252, %v264
        %v275 = vadd.f32 %v255, %v267
        %v276 = vadd.f32 %v258, %v270
        %v277 = vadd.f32 %v261, %v273
        %v278 = vmul.f32 %v240, %v240
        %v279 = vmul.f32 %v241, %v241
        %v280 = vmul.f32 %v242, %v242
        %v281 = vmul.f32 %v243, %v243
        %v282 = vsel %vm249, %v278, 0.0
        %283 = vadd.xlane.f32.xlu0 %v282
        %v284 = vpop.xlane.xlu0 %283
        %v285 = vsel %vm249, %v279, 0.0
        %286 = vadd.xlane.f32.xlu0 %v285
        %v287 = vpop.xlane.xlu0 %286
        %v288 = vsel %vm249, %v280, 0.0
        %289 = vadd.xlane.f32.xlu0 %v288
        %v290 = vpop.xlane.xlu0 %289
        %v291 = vsel %vm249, %v281, 0.0
        %292 = vadd.xlane.f32.xlu0 %v291
        %v293 = vpop.xlane.xlu0 %292
        %v294 = vmul.f32 %v245, %v245
        %v295 = vmul.f32 %v246, %v246
        %v296 = vmul.f32 %v247, %v247
        %v297 = vmul.f32 %v248, %v248
        %v298 = vsel %vm249, %v294, 0.0
        %299 = vadd.xlane.f32.xlu0 %v298
        %v300 = vpop.xlane.xlu0 %299
        %v301 = vsel %vm249, %v295, 0.0
        %302 = vadd.xlane.f32.xlu0 %v301
        %v303 = vpop.xlane.xlu0 %302
        %v304 = vsel %vm249, %v296, 0.0
        %305 = vadd.xlane.f32.xlu0 %v304
        %v306 = vpop.xlane.xlu0 %305
        %v307 = vsel %vm249, %v297, 0.0
        %308 = vadd.xlane.f32.xlu0 %v307
        %v309 = vpop.xlane.xlu0 %308
        %v310 = vadd.f32 %v284, %v300
        %v311 = vadd.f32 %v287, %v303
        %v312 = vadd.f32 %v290, %v306
        %v313 = vadd.f32 %v293, %v309
        %v314 = vmul.f32 %v274, 0.0078125
        %v315 = vmul.f32 %v275, 0.0078125
        %v316 = vmul.f32 %v276, 0.0078125
        %v317 = vmul.f32 %v277, 0.0078125
        %v318 = vmul.f32 %v310, 0.0078125
        %v319 = vmul.f32 %v311, 0.0078125
        %v320 = vmul.f32 %v312, 0.0078125
        %v321 = vmul.f32 %v313, 0.0078125
        %v322 = vmul.f32 %v314, %v314
        %v323 = vmul.f32 %v315, %v315
        %v324 = vmul.f32 %v316, %v316
        %v325 = vmul.f32 %v317, %v317
        %v326 = vsub.f32 %v318, %v322
        %v327 = vsub.f32 %v319, %v323
        %v328 = vsub.f32 %v320, %v324
        %v329 = vsub.f32 %v321, %v325
        %v330 = vmax.f32 %v326, 0.0
        %v331 = vmax.f32 %v327, 0.0
        %v332 = vmax.f32 %v328, 0.0
        %v333 = vmax.f32 %v329, 0.0
        %v334 = vadd.f32 %v330, 1e-05
        %v335 = vadd.f32 %v331, 1e-05
        %v336 = vadd.f32 %v332, 1e-05
        %v337 = vadd.f32 %v333, 1e-05
        %v338 = vrsqrt.pop %v334
        %v339 = vmul.f32 %v338, %v334
        %v340 = vmul.f32 %v339, %v338
        %v341 = vmul.f32 0.5, %v340
        %v342 = vsub.f32 1.5, %v341
        %v343 = vmul.f32 %v338, %v342
        %vm344 = vweird.f32 %v334
        %vm345 = vweird.f32 %v338
        %vm346 = vmor %vm344, %vm345
        %v347 = vsel %vm346, %v338, %v343
        %v348 = vrsqrt.pop %v335
        %v349 = vmul.f32 %v348, %v335
        %v350 = vmul.f32 %v349, %v348
        %v351 = vmul.f32 0.5, %v350
        %v352 = vsub.f32 1.5, %v351
        %v353 = vmul.f32 %v348, %v352
        %vm354 = vweird.f32 %v335
        %vm355 = vweird.f32 %v348
        %vm356 = vmor %vm354, %vm355
        %v357 = vsel %vm356, %v348, %v353
        %v358 = vrsqrt.pop %v336
        %v359 = vmul.f32 %v358, %v336
        %v360 = vmul.f32 %v359, %v358
        %v361 = vmul.f32 0.5, %v360
        %v362 = vsub.f32 1.5, %v361
        %v363 = vmul.f32 %v358, %v362
        %vm364 = vweird.f32 %v336
        %vm365 = vweird.f32 %v358
        %vm366 = vmor %vm364, %vm365
        %v367 = vsel %vm366, %v358, %v363
        %v368 = vrsqrt.pop %v337
        %v369 = vmul.f32 %v368, %v337
        %v370 = vmul.f32 %v369, %v368
        %v371 = vmul.f32 0.5, %v370
        %v372 = vsub.f32 1.5, %v371
        %v373 = vmul.f32 %v368, %v372
        %vm374 = vweird.f32 %v337
        %vm375 = vweird.f32 %v368
        %vm376 = vmor %vm374, %vm375
        %v377 = vsel %vm376, %v368, %v373
        %v378 = vld [vmem:[#allocation4] sm:$0xff]
        %v379 = vld [vmem:[#allocation4 + $0x8] sm:$0xff]
        %v380 = vld [vmem:[#allocation4 + $0x10] sm:$0xff]
        %v381 = vld [vmem:[#allocation4 + $0x18] sm:$0xff]
        %v382 = vld [vmem:[#allocation4 + $0x20] sm:$0xff]
        %v383 = vld [vmem:[#allocation4 + $0x28] sm:$0xff]
        %v384 = vld [vmem:[#allocation4 + $0x30] sm:$0xff]
        %v385 = vld [vmem:[#allocation4 + $0x38] sm:$0xff]
        %s386 = scalar_lea.vmem [#allocation4], 64
        %v387 = vld [vmem:[%s386] sm:$0xff]
        %v388 = vld [vmem:[%s386 + $0x8] sm:$0xff]
        %v389 = vld [vmem:[%s386 + $0x10] sm:$0xff]
        %v390 = vld [vmem:[%s386 + $0x18] sm:$0xff]
        %v391 = vld [vmem:[%s386 + $0x20] sm:$0xff]
        %v392 = vld [vmem:[%s386 + $0x28] sm:$0xff]
        %v393 = vld [vmem:[%s386 + $0x30] sm:$0xff]
        %v394 = vld [vmem:[%s386 + $0x38] sm:$0xff]
        %v396 = vsel %vm249, %v245, 0
        %v399 = vsel %vm249, %v246, 0
        %v402 = vsel %vm249, %v247, 0
        %v405 = vsel %vm249, %v248, 0
        %407 = vmatpush.msra.mxu0 0.0
        %408 = vmatpush.msra.mxu0 0.0
        %409 = vmatpush.msra.mxu0 0.0
        %410 = vmatpush.msra.mxu0 0.0
        %411 = vmatpush.msra.mxu0 0.0
        %412 = vmatpush.msra.mxu0 0.0
        %413 = vmatpush.msra.mxu0 0.0
        %414 = vmatpush.msra.mxu0 0.0
        %415 = vmatpush.msra.mxu0 %v394
        %416 = vmatpush.msra.mxu0 %v393
        %417 = vmatpush.msra.mxu0 %v392
        %418 = vmatpush.msra.mxu0 %v391
        %419 = vmatpush.msra.mxu0 %v390
        %420 = vmatpush.msra.mxu0 %v389
        %421 = vmatpush.msra.mxu0 %v388
        %422 = vmatpush.msra.mxu0 %v387
        %423 = vmatmul.f32.gmra.mxu0 %v396
        %v424 = vpop.f32.mrf.mxu0
        %v425 = vadd.f32 0.0, %v424
        %426 = vmatmul.f32.gmra.mxu0 %v399
        %v427 = vpop.f32.mrf.mxu0
        %v428 = vadd.f32 0.0, %v427
        %429 = vmatmul.f32.gmra.mxu0 %v402
        %v430 = vpop.f32.mrf.mxu0
        %v431 = vadd.f32 0.0, %v430
        %432 = vmatmul.f32.gmra.mxu0 %v405
        %v433 = vpop.f32.mrf.mxu0
        %v434 = vadd.f32 0.0, %v433
        %435 = vdwg.mxu0
        %v437 = vsel %vm249, %v240, 0
        %v440 = vsel %vm249, %v241, 0
        %v443 = vsel %vm249, %v242, 0
        %v446 = vsel %vm249, %v243, 0
        %448 = vmatpush.msra.mxu0 0.0
        %449 = vmatpush.msra.mxu0 0.0
        %450 = vmatpush.msra.mxu0 0.0
        %451 = vmatpush.msra.mxu0 0.0
        %452 = vmatpush.msra.mxu0 0.0
        %453 = vmatpush.msra.mxu0 0.0
        %454 = vmatpush.msra.mxu0 0.0
        %455 = vmatpush.msra.mxu0 0.0
        %456 = vmatpush.msra.mxu0 %v385
        %457 = vmatpush.msra.mxu0 %v384
        %458 = vmatpush.msra.mxu0 %v383
        %459 = vmatpush.msra.mxu0 %v382
        %460 = vmatpush.msra.mxu0 %v381
        %461 = vmatpush.msra.mxu0 %v380
        %462 = vmatpush.msra.mxu0 %v379
        %463 = vmatpush.msra.mxu0 %v378
        %464 = vmatmul.f32.gmra.mxu0 %v437
        %v465 = vpop.f32.mrf.mxu0
        %v466 = vadd.f32 %v425, %v465
        %467 = vmatmul.f32.gmra.mxu0 %v440
        %v468 = vpop.f32.mrf.mxu0
        %v469 = vadd.f32 %v428, %v468
        %470 = vmatmul.f32.gmra.mxu0 %v443
        %v471 = vpop.f32.mrf.mxu0
        %v472 = vadd.f32 %v431, %v471
        %473 = vmatmul.f32.gmra.mxu0 %v446
        %v474 = vpop.f32.mrf.mxu0
        %v475 = vadd.f32 %v434, %v474
        %476 = vdwg.mxu0
        %v477 = vld [vmem:[%s2] sm:$0x1]
        %v479 = vperm.slane %v477, 0
        %v481 = vmul.f32 %v314, %v479
        %v482 = vmul.f32 %v315, %v479
        %v483 = vmul.f32 %v316, %v479
        %v484 = vmul.f32 %v317, %v479
        %v485 = vsub.f32 %v466, %v481
        %v486 = vsub.f32 %v469, %v482
        %v487 = vsub.f32 %v472, %v483
        %v488 = vsub.f32 %v475, %v484
        %v489 = vmul.f32 %v485, %v347
        %v490 = vmul.f32 %v486, %v357
        %v491 = vmul.f32 %v487, %v367
        %v492 = vmul.f32 %v488, %v377
        %v493 = vld [vmem:[%s3] sm:$0x1]
        %v495 = vperm.slane %v493, 0
        %v497 = vadd.f32 %v489, %v495
        %v498 = vadd.f32 %v490, %v495
        %v499 = vadd.f32 %v491, %v495
        %v500 = vadd.f32 %v492, %v495
        %501 = vst.msk [vmem:[%s238] sm:$0xff] %vm249, %v497
        %502 = vst.msk [vmem:[%s238 + $0x8] sm:$0xff] %vm249, %v498
        %503 = vst.msk [vmem:[%s238 + $0x10] sm:$0xff] %vm249, %v499
        %504 = vst.msk [vmem:[%s238 + $0x18] sm:$0xff] %vm249, %v500
        %s505 = smul.u32 4, %s19
        %p506 = scmp.lt.s32.totalorder %s505, 15
        %s507 = scalar_select %p506, %s505, 15
        %s508 = smul.addr %s507, 8
        %s509 = scalar_lea.vmem %s4, %s508
        // Predicated region
        $region45: #{tpu_custom_call.1} parent=35 // pred_check
          %p510 = pneg %p126
        $region46: #{tpu_custom_call.1} parent=35 // pred_check_branch
          %512 = sbr.rel (%p510) target = $region48
        $region47: #{tpu_custom_call.1} parent=35 // pred_region
          %s513 = smul.u32 4, %s19
        $region48: #{tpu_custom_call.1} parent=35 // pred_fallthru
          _
      $region36: #{tpu_custom_call.1} parent=5 // pred_fallthru
        _
      %p514 = scmp.le.s32.totalorder 2, %s14
      // Predicated region
      $region49: #{tpu_custom_call.1} parent=5 // pred_check
        %p515 = pneg %p514
      $region50: #{tpu_custom_call.1} parent=5 // pred_check_branch
        %517 = sbr.rel (%p515) target = $region52
      $region51: #{tpu_custom_call.1} parent=5 // pred_region
        %s518 = ssub.s32 %s14, 2
        // Predicated region
        $region53: #{tpu_custom_call.1} parent=51 // pred_check
          %p519 = pneg %p132
        $region54: #{tpu_custom_call.1} parent=51 // pred_check_branch
          %521 = sbr.rel (%p519) target = $region56
        $region55: #{tpu_custom_call.1} parent=51 // pred_region
          %s522 = smul.u32 4, %s20
          %p523 = scmp.lt.s32.totalorder %s522, 15
          %s524 = scalar_select %p523, %s522, 15
          %s525 = smul.addr %s524, 8
          %s526 = scalar_lea.vmem %s4, %s525
        $region56: #{tpu_custom_call.1} parent=51 // pred_fallthru
          _
      $region52: #{tpu_custom_call.1} parent=5 // pred_fallthru
        _
    $region6: #{tpu_custom_call.1} parent=1 // loop_footer
      %s18 = sadd.s32 1, %s14
    $region7: #{tpu_custom_call.1} parent=1 // loop_footer_branch
      %13 = sbr.rel target = $region3
    $region8: #{tpu_custom_call.1} parent=1 // loop_exit
      _
    %527 = vsyncpa [#allocation3], 1
    %s528 = scalar_lea.sflag [#allocation3], 1
    %529 = vsyncpa %s528, 1
    %530 = vsyncpa [#allocation5], 1

</llo_original>
